<compile_context>
chip_gen: v6e
topology: v6e:2x2x1
jax: 0.10.0
libtpu: 0.0.40
codegen_flags: <defaults>
</compile_context>

<pallas_src>
import jax
import jax.numpy as jnp
from jax import lax
from jax.experimental import pallas as pl
from jax.experimental.pallas import tpu as pltpu

LANE = 128
MAX_TM = 512  # row-tile cap: (512,128) f32 = 256 KiB per input per buffer


def _theta_reg_kernel(total_ref, ms_ref, s_ref, r_ref, out_sq_ref, out_v_ref):
    """One grid step: reduce a (TM, 128) tile to (8, 128) partial sums."""
    i = pl.program_id(0)
    tm, lane = s_ref.shape  # static Python ints

    s = s_ref[...].astype(jnp.float32)
    r = r_ref[...].astype(jnp.float32)
    viol = jnp.maximum(r + ms_ref[0] - s, 0.0)

    # Mask the ragged tail / out-of-bounds rows of the (possibly partial)
    # last block using the true element count.
    row = lax.broadcasted_iota(jnp.int32, (tm, lane), 0)
    col = lax.broadcasted_iota(jnp.int32, (tm, lane), 1)
    gidx = (i * tm + row) * lane + col
    viol = jnp.where(gidx < total_ref[0], viol, 0.0)

    # Pure-VPU partial reduction: fold the TM rows into one (8,128) slab.
    v3 = viol.reshape(tm // 8, 8, lane)
    out_v_ref[0] = jnp.sum(v3, axis=0)
    out_sq_ref[0] = jnp.sum(v3 * v3, axis=0)


def theta_reg(thetaS: jax.Array, thetaR: jax.Array, min_storage=0.0):
    """Pallas implementation of ThetaReg.forward. Returns {"Theta": scalar f32}."""
    assert thetaS.shape == thetaR.shape

    # Keep bf16/f32 inputs in their native dtype (halves HBM traffic for bf16);
    # everything else is streamed as f32.  Upcast happens inside the kernel.
    if thetaS.dtype in (jnp.dtype(jnp.float32), jnp.dtype(jnp.bfloat16)):
        work_dtype = thetaS.dtype
    else:
        work_dtype = jnp.dtype(jnp.float32)
    ralign = 8 if work_dtype.itemsize == 4 else 16  # min sublane tile

    s = thetaS.reshape(-1).astype(work_dtype)
    r = thetaR.reshape(-1).astype(work_dtype)
    total = int(s.shape[0])

    # Pad only the ragged tail (and tiny inputs) so the flat vector can be
    # viewed as (M, 128) with at least `ralign` rows.  Zero-copy when
    # total % 128 == 0 and total >= ralign*128 (the common case).
    pad_elems = (-total) % LANE
    M = (total + pad_elems) // LANE
    row_pad = ralign - M if M < ralign else 0
    pad_total = pad_elems + row_pad * LANE
    if pad_total:
        z = jnp.zeros((pad_total,), work_dtype)
        s = jnp.concatenate([s, z])
        r = jnp.concatenate([r, z])
        M += row_pad

    s2 = s.reshape(M, LANE)
    r2 = r.reshape(M, LANE)

    TM = min(MAX_TM, (M // ralign) * ralign)
    nblocks = -(-M // TM)

    total_arr = jnp.array([total], dtype=jnp.int32)
    ms_arr = jnp.array([min_storage], dtype=jnp.float32)

    part_sq, part_v = pl.pallas_call(
        _theta_reg_kernel,
        out_shape=(
            jax.ShapeDtypeStruct((nblocks, 8, LANE), jnp.float32),
            jax.ShapeDtypeStruct((nblocks, 8, LANE), jnp.float32),
        ),
        grid_spec=pltpu.PrefetchScalarGridSpec(
            num_scalar_prefetch=0,
            grid=(nblocks,),
            in_specs=[
                pl.BlockSpec(memory_space=pltpu.MemorySpace.SMEM),  # total
                pl.BlockSpec(memory_space=pltpu.MemorySpace.SMEM),  # min_storage
                pl.BlockSpec((TM, LANE), lambda i: (i, 0)),
                pl.BlockSpec((TM, LANE), lambda i: (i, 0)),
            ],
            out_specs=[
                pl.BlockSpec((1, 8, LANE), lambda i: (i, 0, 0)),
                pl.BlockSpec((1, 8, LANE), lambda i: (i, 0, 0)),
            ],
        ),
        compiler_params=pltpu.CompilerParams(
            dimension_semantics=("parallel",),
        ),
    )(total_arr, ms_arr, s2, r2)

    # Tiny finalize (nblocks * 1024 elements) done in JAX so the grid axis can
    # be sharded across both v7x TensorCores (no carried accumulator).
    sum_sq = jnp.sum(part_sq)
    sum_v = jnp.sum(part_v)
    loss = sum_sq / jnp.maximum(sum_v, jnp.float32(1.0))
    return {"Theta": loss}


def theta_reg_ref(thetaS, thetaR, min_storage=0.0):
    """Pure-JAX reference mirroring the PyTorch code."""
    viol = jnp.maximum(thetaR.astype(jnp.float32) + min_storage
                       - thetaS.astype(jnp.float32), 0.0)
    return {"Theta": jnp.sum(viol * viol) / jnp.maximum(jnp.sum(viol), 1.0)}


if __name__ == "__main__":
    key = jax.random.PRNGKey(0)
    k1, k2 = jax.random.split(key)
    shape = (2, 4, 16, 16)  # NCHW-style example input
    thetaS = jax.random.uniform(k1, shape, dtype=jnp.float32)
    thetaR = jax.random.uniform(k2, shape, dtype=jnp.float32)

    out = theta_reg(thetaS, thetaR, min_storage=0.0)
    loss = jax.block_until_ready(out["Theta"])

    ref = theta_reg_ref(thetaS, thetaR, min_storage=0.0)["Theta"]
    assert jnp.allclose(loss, ref, rtol=1e-5, atol=1e-6), (loss, ref)

    print("KERNEL_OK")
</pallas_src>

<mosaic_0001>
module attributes {stable_mosaic.version = 11 : i64} {
  func.func @_theta_reg_kernel(%arg0: i32, %arg1: memref<1xi32, #tpu.memory_space<smem>>, %arg2: memref<1xf32, #tpu.memory_space<smem>>, %arg3: memref<16x128xf32, #tpu.memory_space<vmem>>, %arg4: memref<16x128xf32, #tpu.memory_space<vmem>>, %arg5: memref<1x8x128xf32, #tpu.memory_space<vmem>>, %arg6: memref<1x8x128xf32, #tpu.memory_space<vmem>>) attributes {dimension_semantics = [#tpu.dimension_semantics<parallel>], iteration_bounds = array<i64: 1>, scalar_prefetch = 0 : i64, scratch_operands = 0 : i64, tpu.core_type = #tpu.core_type<tc>, window_params = [{transform_indices = @transform_0, window_bounds = array<i64: 1>}, {transform_indices = @transform_1, window_bounds = array<i64: 1>}, {transform_indices = @transform_2, window_bounds = array<i64: 16, 128>}, {transform_indices = @transform_3, window_bounds = array<i64: 16, 128>}, {transform_indices = @transform_4, window_bounds = array<i64: 1, 8, 128>}, {transform_indices = @transform_5, window_bounds = array<i64: 1, 8, 128>}]} {
    %c0 = arith.constant 0 : index
    %c0_0 = arith.constant 0 : index
    %0 = vector.load %arg3[%c0, %c0_0] : memref<16x128xf32, #tpu.memory_space<vmem>>, vector<16x128xf32>
    %c0_1 = arith.constant 0 : index
    %c0_2 = arith.constant 0 : index
    %1 = vector.load %arg4[%c0_1, %c0_2] : memref<16x128xf32, #tpu.memory_space<vmem>>, vector<16x128xf32>
    %c0_3 = arith.constant 0 : index
    %2 = memref.load %arg2[%c0_3] : memref<1xf32, #tpu.memory_space<smem>>
    %3 = vector.broadcast %2 : f32 to vector<16x128xf32>
    %4 = arith.addf %1, %3 : vector<16x128xf32>
    %5 = arith.subf %4, %0 : vector<16x128xf32>
    %cst = arith.constant 0.000000e+00 : f32
    %6 = vector.broadcast %cst : f32 to vector<16x128xf32>
    %7 = arith.maximumf %5, %6 : vector<16x128xf32>
    %8 = tpu.iota {dimensions = array<i32: 0>} : vector<16x128xi32>
    %9 = tpu.iota {dimensions = array<i32: 1>} : vector<16x128xi32>
    %c16_i32 = arith.constant 16 : i32
    %10 = arith.muli %arg0, %c16_i32 : i32
    %11 = vector.broadcast %10 : i32 to vector<16x128xi32>
    %12 = arith.addi %11, %8 : vector<16x128xi32>
    %c128_i32 = arith.constant 128 : i32
    %13 = vector.broadcast %c128_i32 : i32 to vector<16x128xi32>
    %14 = arith.muli %12, %13 : vector<16x128xi32>
    %15 = arith.addi %14, %9 : vector<16x128xi32>
    %c0_4 = arith.constant 0 : index
    %16 = memref.load %arg1[%c0_4] : memref<1xi32, #tpu.memory_space<smem>>
    %17 = vector.broadcast %16 : i32 to vector<16x128xi32>
    %18 = arith.cmpi slt, %15, %17 : vector<16x128xi32>
    %cst_5 = arith.constant 0.000000e+00 : f32
    %19 = vector.broadcast %cst_5 : f32 to vector<16x128xf32>
    %20 = arith.select %18, %7, %19 : vector<16x128xi1>, vector<16x128xf32>
    %21 = vector.shape_cast %20 : vector<16x128xf32> to vector<2x8x128xf32>
    %cst_6 = arith.constant dense<0.000000e+00> : vector<8x128xf32>
    %22 = vector.multi_reduction <add>, %21, %cst_6 [0] : vector<2x8x128xf32> to vector<8x128xf32>
    %c0_7 = arith.constant 0 : index
    %c0_8 = arith.constant 0 : index
    %c0_9 = arith.constant 0 : index
    %23 = vector.load %arg6[%c0_7, %c0_8, %c0_9] : memref<1x8x128xf32, #tpu.memory_space<vmem>>, vector<1x8x128xf32>
    %24 = vector.shape_cast %23 : vector<1x8x128xf32> to vector<8x128xf32>
    %25 = vector.shape_cast %22 : vector<8x128xf32> to vector<1x8x128xf32>
    tpu.vector_store %arg6[%c0_7, %c0_8, %c0_9], %25 {strides = array<i32>} : memref<1x8x128xf32, #tpu.memory_space<vmem>>, vector<1x8x128xf32>,
    %26 = arith.mulf %21, %21 : vector<2x8x128xf32>
    %cst_10 = arith.constant dense<0.000000e+00> : vector<8x128xf32>
    %27 = vector.multi_reduction <add>, %26, %cst_10 [0] : vector<2x8x128xf32> to vector<8x128xf32>
    %c0_11 = arith.constant 0 : index
    %c0_12 = arith.constant 0 : index
    %c0_13 = arith.constant 0 : index
    %28 = vector.load %arg5[%c0_11, %c0_12, %c0_13] : memref<1x8x128xf32, #tpu.memory_space<vmem>>, vector<1x8x128xf32>
    %29 = vector.shape_cast %28 : vector<1x8x128xf32> to vector<8x128xf32>
    %30 = vector.shape_cast %27 : vector<8x128xf32> to vector<1x8x128xf32>
    tpu.vector_store %arg5[%c0_11, %c0_12, %c0_13], %30 {strides = array<i32>} : memref<1x8x128xf32, #tpu.memory_space<vmem>>, vector<1x8x128xf32>,
    return
  }
  func.func @transform_0(%arg0: i32) -> i32 {
    %c0_i32 = arith.constant 0 : i32
    %c0_i32_0 = arith.constant 0 : i32
    return %c0_i32 : i32
  }
  func.func @transform_1(%arg0: i32) -> i32 {
    %c0_i32 = arith.constant 0 : i32
    %c0_i32_0 = arith.constant 0 : i32
    return %c0_i32 : i32
  }
  func.func @transform_2(%arg0: i32) -> (i32, i32) {
    %c0_i32 = arith.constant 0 : i32
    %c0_i32_0 = arith.constant 0 : i32
    return %arg0, %c0_i32 : i32, i32
  }
  func.func @transform_3(%arg0: i32) -> (i32, i32) {
    %c0_i32 = arith.constant 0 : i32
    %c0_i32_0 = arith.constant 0 : i32
    return %arg0, %c0_i32 : i32, i32
  }
  func.func @transform_4(%arg0: i32) -> (i32, i32, i32) {
    %c0_i32 = arith.constant 0 : i32
    %c0_i32_0 = arith.constant 0 : i32
    %c0_i32_1 = arith.constant 0 : i32
    return %arg0, %c0_i32, %c0_i32_0 : i32, i32, i32
  }
  func.func @transform_5(%arg0: i32) -> (i32, i32, i32) {
    %c0_i32 = arith.constant 0 : i32
    %c0_i32_0 = arith.constant 0 : i32
    %c0_i32_1 = arith.constant 0 : i32
    return %arg0, %c0_i32, %c0_i32_0 : i32, i32, i32
  }
}

</mosaic_0001>

<llo_original>
// kernel: tpu_custom_call.1
$region0: #{tpu_custom_call.1}
  #allocation0 [shape = 'u32[]', space=smem, size = 0x4, offset = 0x4, fixed_abs, tag = 'smem constant byte address 0x4 - core index']
  #allocation1 [shape = 'u32[144,128]{1,0:T(1,128)}', space=vmem, size = 0x12000, scoped, tag = 'internal scratch']
  #allocation2 [shape = 's32[1]{0:T(128)S(6)}', space=smem, size = 0x200, scoped, tag = 'scoped memory for tpu_custom_call.1']
  #allocation3 [shape = 'f32[1]{0:T(128)S(6)}', space=smem, size = 0x200, scoped, tag = 'scoped memory for tpu_custom_call.1']
  %s0 = inlined_call_operand.<no memory space> [shape: s32[1], index: 0, kind: input, shape index: {}]
  %s1 = inlined_call_operand.<no memory space> [shape: f32[1], index: 1, kind: input, shape index: {}]
  %s2 = inlined_call_operand.hbm [shape: f32[16,128], index: 2, kind: input, shape index: {}]
  %s3 = inlined_call_operand.hbm [shape: f32[16,128], index: 3, kind: input, shape index: {}]
  %s4 = inlined_call_operand.hbm [shape: f32[1,8,128], index: 4, kind: output, shape index: {0}]
  %s5 = inlined_call_operand.hbm [shape: f32[1,8,128], index: 5, kind: output, shape index: {1}]
  %6 = xla_tuple %s4, %s5
  %s7 = sld [smem:[#allocation0]]
  $region42: #{tpu_custom_call.1} parent=0
    _
  %s9 = ssub.s32 1, %s7
  %s10 = scalar_select 0, %s9, %s7
  %11 = sst [smem:[#allocation2]] %s0
  %12 = sst [smem:[#allocation3]] %s1
  $region1: #{tpu_custom_call.1} parent=0
    #allocation4 [shape = 'u8[8192]{0}', space=vmem, size = 0x2000, scoped, tag = 'input window, operand 2, single buffered']
    #allocation5 [shape = 's32[1]{0}', space=sflag, size = 0x4, scoped, tag = 'scoped memory for tpu_custom_call.1']
    #allocation6 [shape = 's32[1]{0}', space=sflag, size = 0x4, scoped, tag = 'scoped memory for tpu_custom_call.1']
    #allocation7 [shape = 'u8[8192]{0}', space=vmem, size = 0x2000, scoped, tag = 'input window, operand 3, single buffered']
    #allocation8 [shape = 's32[1]{0}', space=sflag, size = 0x4, scoped, tag = 'scoped memory for tpu_custom_call.1']
    #allocation9 [shape = 'u8[4096]{0}', space=vmem, size = 0x1000, scoped, tag = 'output window, operand 0, single buffered']
    #allocation10 [shape = 'u8[4096]{0}', space=vmem, size = 0x1000, scoped, tag = 'output window, operand 1, single buffered']
    #allocation11 [shape = 's32[1]{0}', space=sflag, size = 0x4, scoped, tag = 'scoped memory for tpu_custom_call.1']
    %13 = vsyncpa [#allocation5], 0
    %14 = vsyncpa [#allocation8], 0
    %15 = vsyncpa [#allocation6], 0
    %16 = vsyncpa [#allocation11], 0
    // Predicated region
    $region2: #{tpu_custom_call.1} parent=1 // pred_check
      _
    $region3: #{tpu_custom_call.1} parent=1 // pred_check_branch
      %18 = sbr.rel (0) target = $region5
    $region4: #{tpu_custom_call.1} parent=1 // pred_region
      _
    $region5: #{tpu_custom_call.1} parent=1 // pred_fallthru
      _
    // Predicated region
    $region6: #{tpu_custom_call.1} parent=1 // pred_check
      _
    $region7: #{tpu_custom_call.1} parent=1 // pred_check_branch
      %20 = sbr.rel (0) target = $region9
    $region8: #{tpu_custom_call.1} parent=1 // pred_region
      _
    $region9: #{tpu_custom_call.1} parent=1 // pred_fallthru
      _
    // Predicated region
    $region10: #{tpu_custom_call.1} parent=1 // pred_check
      _
    $region11: #{tpu_custom_call.1} parent=1 // pred_check_branch
      %22 = sbr.rel (0) target = $region13
    $region12: #{tpu_custom_call.1} parent=1 // pred_region
      %s24 = ssub.s32 256, 256
      %25 = vsyncadd [#allocation5], %s24
      %s26 = sshll.u32 [#allocation4], 4
      %s27 = int_to_ptr.vmem [resolvable:$true] %s26
      %32 = dma.hbm_to_vmem [thread:$0]  %s2, 256, %s27, [#allocation5], 128, 128, 8
    $region13: #{tpu_custom_call.1} parent=1 // pred_fallthru
      _
    // Predicated region
    $region14: #{tpu_custom_call.1} parent=1 // pred_check
      _
    $region15: #{tpu_custom_call.1} parent=1 // pred_check_branch
      %34 = sbr.rel (0) target = $region17
    $region16: #{tpu_custom_call.1} parent=1 // pred_region
      %s36 = ssub.s32 256, 256
      %37 = vsyncadd [#allocation8], %s36
      %s38 = sshll.u32 [#allocation7], 4
      %s39 = int_to_ptr.vmem [resolvable:$true] %s38
      %44 = dma.hbm_to_vmem [thread:$0]  %s3, 256, %s39, [#allocation8], 128, 128, 8
    $region17: #{tpu_custom_call.1} parent=1 // pred_fallthru
      _
    // Predicated region
    $region18: #{tpu_custom_call.1} parent=1 // pred_check
      _
    $region19: #{tpu_custom_call.1} parent=1 // pred_check_branch
      %46 = sbr.rel (0) target = $region21
    $region20: #{tpu_custom_call.1} parent=1 // pred_region
      %47 = dma.done [#allocation5], 256
    $region21: #{tpu_custom_call.1} parent=1 // pred_fallthru
      _
    // Predicated region
    $region22: #{tpu_custom_call.1} parent=1 // pred_check
      _
    $region23: #{tpu_custom_call.1} parent=1 // pred_check_branch
      %49 = sbr.rel (0) target = $region25
    $region24: #{tpu_custom_call.1} parent=1 // pred_region
      %50 = dma.done [#allocation8], 256
    $region25: #{tpu_custom_call.1} parent=1 // pred_fallthru
      _
    %v51 = vld [vmem:[#allocation4] sm:$0xff]
    %v52 = vld [vmem:[#allocation4 + $0x8] sm:$0xff]
    %v53 = vld [vmem:[#allocation7] sm:$0xff]
    %v54 = vld [vmem:[#allocation7 + $0x8] sm:$0xff]
    %s55 = sld [smem:[#allocation3]]
    %v56 = vstv %s55
    %v57 = vadd.f32 %v53, %v56
    %v58 = vadd.f32 %v54, %v56
    %v59 = vsub.f32 %v57, %v51
    %v60 = vsub.f32 %v58, %v52
    %v61 = vmax.f32 %v59, 0.0
    %v62 = vmax.f32 %v60, 0.0
    %v63 = vlaneseq
    %v64 = vshrl.u32 %v63, 7
    %v65 = vadd.s32 %v64, 8
    %v66 = vlaneseq
    %v67 = vand.u32 %v66, 127
    %s68 = smul.u32 0, 16
    %v69 = vstv %s68
    %v70 = vadd.s32 %v69, %v64
    %v71 = vadd.s32 %v69, %v65
    %v72 = vmul.u32 %v70, 128
    %v73 = vmul.u32 %v71, 128
    %v74 = vadd.s32 %v72, %v67
    %v75 = vadd.s32 %v73, %v67
    %s76 = sld [smem:[#allocation2]]
    %v77 = vstv %s76
    %vm78 = vcmp.lt.s32.totalorder %v74, %v77
    %vm79 = vcmp.lt.s32.totalorder %v75, %v77
    %v80 = vsel %vm78, %v61, 0.0
    %v81 = vsel %vm79, %v62, 0.0
    %v82 = vadd.f32 %v80, %v81
    %83 = vst [vmem:[#allocation10] sm:$0xff] %v82
    %v84 = vmul.f32 %v80, %v80
    %v85 = vmul.f32 %v81, %v81
    %v86 = vadd.f32 %v84, %v85
    %87 = vst [vmem:[#allocation9] sm:$0xff] %v86
    // Predicated region
    $region26: #{tpu_custom_call.1} parent=1 // pred_check
      _
    $region27: #{tpu_custom_call.1} parent=1 // pred_check_branch
      %89 = sbr.rel (0) target = $region29
    $region28: #{tpu_custom_call.1} parent=1 // pred_region
      %s91 = ssub.s32 128, 128
      %92 = vsyncadd [#allocation6], %s91
      %s94 = sshll.u32 [#allocation9], 4
      %s95 = int_to_ptr.vmem [resolvable:$true] %s94
      %97 = dma.vmem_to_hbm [thread:$0]  %s95, 128, %s4, [#allocation6]
    $region29: #{tpu_custom_call.1} parent=1 // pred_fallthru
      _
    // Predicated region
    $region30: #{tpu_custom_call.1} parent=1 // pred_check
      _
    $region31: #{tpu_custom_call.1} parent=1 // pred_check_branch
      %99 = sbr.rel (0) target = $region33
    $region32: #{tpu_custom_call.1} parent=1 // pred_region
      %s101 = ssub.s32 128, 128
      %102 = vsyncadd [#allocation11], %s101
      %s104 = sshll.u32 [#allocation10], 4
      %s105 = int_to_ptr.vmem [resolvable:$true] %s104
      %107 = dma.vmem_to_hbm [thread:$0]  %s105, 128, %s5, [#allocation11]
    $region33: #{tpu_custom_call.1} parent=1 // pred_fallthru
      _
    // Predicated region
    $region34: #{tpu_custom_call.1} parent=1 // pred_check
      _
    $region35: #{tpu_custom_call.1} parent=1 // pred_check_branch
      %109 = sbr.rel (0) target = $region37
    $region36: #{tpu_custom_call.1} parent=1 // pred_region
      %110 = dma.done [#allocation6], 128
    $region37: #{tpu_custom_call.1} parent=1 // pred_fallthru
      _
    // Predicated region
    $region38: #{tpu_custom_call.1} parent=1 // pred_check
      _
    $region39: #{tpu_custom_call.1} parent=1 // pred_check_branch
      %112 = sbr.rel (0) target = $region41
    $region40: #{tpu_custom_call.1} parent=1 // pred_region
      %113 = dma.done [#allocation11], 128
    $region41: #{tpu_custom_call.1} parent=1 // pred_fallthru
      _
    %114 = vsyncpa [#allocation5], 1
    %115 = vsyncpa [#allocation8], 1
    %116 = vsyncpa [#allocation6], 1
    %117 = vsyncpa [#allocation11], 1

</llo_original>
